<compile_context>
chip_gen: v7x
topology: tpu7x:2x2x1
jax: 0.10.0
libtpu: 0.0.40
codegen_flags: <defaults>
</compile_context>

<pallas_src>
import functools

import jax
import jax.numpy as jnp
from jax import lax
from jax.experimental import pallas as pl
from jax.experimental.pallas import tpu as pltpu

SMOOTH_NR = 1e-5
SMOOTH_DR = 1e-5
_LANE = 128


def _dice_kernel(yhat_ref, label_ref, out_ref, inter_acc, denom_acc,
                 *, s_total, ragged):
    """Grid = (batch, spatial_tile). Accumulates per-class intersection and
    denominator elementwise across spatial tiles; finalizes per-(b,c) dice
    on the last spatial step."""
    s = pl.program_id(1)
    ns = pl.num_programs(1)

    @pl.when(s == 0)
    def _():
        inter_acc[...] = jnp.zeros_like(inter_acc)
        denom_acc[...] = jnp.zeros_like(denom_acc)

    logits = yhat_ref[0].astype(jnp.float32)      # (C, TS) cast in-register
    labels = label_ref[0].astype(jnp.int32)       # (1, TS)
    C, TS = logits.shape

    # sigmoid(y_hat) -> probabilities (EUP/VPU)
    p = jax.nn.sigmoid(logits)                    # (C, TS)

    # one-hot of labels against class ids (to_onehot_y=True)
    class_ids = lax.broadcasted_iota(jnp.int32, (C, TS), 0)
    onehot = (class_ids == labels).astype(jnp.float32)   # (C, TS)

    if ragged:
        # Mask garbage past S (only the last tile is actually partial; the
        # mask is correct-but-trivially-true on earlier tiles). Static flag
        # keeps this off the evenly-tiled fast path entirely.
        lane_pos = lax.broadcasted_iota(jnp.int32, (C, TS), 1) + s * TS
        valid = lane_pos < s_total
        p = jnp.where(valid, p, 0.0)
        onehot = jnp.where(valid, onehot, 0.0)

    # elementwise (VPU) accumulation; XLU reduce deferred to epilogue
    inter_acc[...] += onehot * p                  # -> sum(g * p)
    denom_acc[...] += onehot + p                  # -> sum(g) + sum(p)

    @pl.when(s == ns - 1)
    def _():
        inter = jnp.sum(inter_acc[...], axis=1, keepdims=True)   # (C, 1)
        denom = jnp.sum(denom_acc[...], axis=1, keepdims=True)   # (C, 1)
        f = 1.0 - (2.0 * inter + SMOOTH_NR) / (denom + SMOOTH_DR)
        out_ref[...] = f[None]                    # (1, C, 1)


def _choose_tile(S, C, itemsize):
    """Lane-dense spatial tile: multiple of 128, ~2 MiB per logits block so
    double-buffered inputs + f32 accumulators stay well under the scoped
    VMEM limit (v7x-safe) while keeping per-step overhead amortized."""
    if S <= _LANE:
        return S
    budget = 2 << 20
    ts = budget // max(1, C * itemsize)
    ts = max(_LANE, min(ts, S))
    return (ts // _LANE) * _LANE


def dice_loss(y_hat, y, *, tile_s=None):
    """y_hat: (B, C, H, W) float logits (any float dtype).
    y: (B, 1, H, W) integer class labels in [0, C)."""
    B, C, H, W = y_hat.shape
    S = H * W
    # reshape only (metadata); dtypes untouched -> cast happens in-kernel
    yhat3 = y_hat.reshape(B, C, S)
    y3 = y.reshape(B, 1, S)

    if tile_s is None:
        tile_s = _choose_tile(S, C, jnp.dtype(yhat3.dtype).itemsize)
    ns = pl.cdiv(S, tile_s)
    ragged = (S % tile_s) != 0

    kernel = functools.partial(_dice_kernel, s_total=S, ragged=ragged)

    per_bc = pl.pallas_call(
        kernel,
        out_shape=jax.ShapeDtypeStruct((B, C, 1), jnp.float32),
        grid_spec=pltpu.PrefetchScalarGridSpec(
            num_scalar_prefetch=0,
            grid=(B, ns),
            in_specs=[
                pl.BlockSpec((1, C, tile_s), lambda b, s: (b, 0, s)),
                pl.BlockSpec((1, 1, tile_s), lambda b, s: (b, 0, s)),
            ],
            out_specs=pl.BlockSpec((1, C, 1), lambda b, s: (b, 0, 0)),
            scratch_shapes=[
                pltpu.VMEM((C, tile_s), jnp.float32),   # intersection partials
                pltpu.VMEM((C, tile_s), jnp.float32),   # ground + pred partials
            ],
        ),
        compiler_params=pltpu.CompilerParams(
            dimension_semantics=("parallel", "arbitrary")),
    )(yhat3, y3)

    # mean over (B, C) in f32 (tiny reduction, done in JAX)
    return jnp.mean(per_bc)


def dice_loss_ref(y_hat, y):
    """Pure-JAX reference (mirrors MONAI DiceLoss defaults)."""
    B, C, H, W = y_hat.shape
    p = jax.nn.sigmoid(y_hat.astype(jnp.float32))
    onehot = jax.nn.one_hot(y[:, 0].astype(jnp.int32), C, axis=1)  # (B, C, H, W)
    inter = jnp.sum(onehot * p, axis=(2, 3))
    ground = jnp.sum(onehot, axis=(2, 3))
    predo = jnp.sum(p, axis=(2, 3))
    f = 1.0 - (2.0 * inter + SMOOTH_NR) / (ground + predo + SMOOTH_DR)
    return jnp.mean(f)


if __name__ == "__main__":
    key = jax.random.PRNGKey(0)
    k1, k2 = jax.random.split(key)
    B, C, H, W = 2, 4, 16, 16
    y_hat = jax.random.normal(k1, (B, C, H, W), dtype=jnp.float32)
    y = jax.random.randint(k2, (B, 1, H, W), 0, C, dtype=jnp.int32)

    ref = dice_loss_ref(y_hat, y)

    # Forced small tile -> exercises the multi-step spatial accumulation
    # path (S=256, tile=128 -> 2 spatial steps, evenly tiled, no masking).
    loss_tiled = dice_loss(y_hat, y, tile_s=128)
    jax.block_until_ready(loss_tiled)
    assert jnp.allclose(loss_tiled, ref, atol=1e-5, rtol=1e-5), (loss_tiled, ref)

    # Non-dividing tile -> exercises the ragged-tail masking path.
    loss_ragged = dice_loss(y_hat, y, tile_s=192)
    jax.block_until_ready(loss_ragged)
    assert jnp.allclose(loss_ragged, ref, atol=1e-5, rtol=1e-5), (loss_ragged, ref)

    # Default tile selection (single spatial step at this small size).
    loss_default = dice_loss(y_hat, y)
    jax.block_until_ready(loss_default)
    assert jnp.allclose(loss_default, ref, atol=1e-5, rtol=1e-5), (loss_default, ref)

    # bf16 logits -> exercises in-register cast path (no wrapper-side astype).
    y_hat_bf16 = y_hat.astype(jnp.bfloat16)
    ref_bf = dice_loss_ref(y_hat_bf16, y)
    loss_bf = dice_loss(y_hat_bf16, y, tile_s=128)
    jax.block_until_ready(loss_bf)
    assert jnp.allclose(loss_bf, ref_bf, atol=1e-4, rtol=1e-4), (loss_bf, ref_bf)

    print("KERNEL_OK")
</pallas_src>

<mosaic_0001>
module attributes {stable_mosaic.version = 11 : i64} {
  func.func @_dice_kernel(%arg0: i32, %arg1: i32, %arg2: memref<1x4x128xf32, #tpu.memory_space<vmem>>, %arg3: memref<1x1x128xi32, #tpu.memory_space<vmem>>, %arg4: memref<1x4x1xf32, #tpu.memory_space<vmem>>, %arg5: memref<4x128xf32, #tpu.memory_space<vmem>>, %arg6: memref<4x128xf32, #tpu.memory_space<vmem>>) attributes {dimension_semantics = [#tpu.dimension_semantics<parallel>, #tpu.dimension_semantics<arbitrary>], iteration_bounds = array<i64: 2, 2>, scalar_prefetch = 0 : i64, scratch_operands = 2 : i64, tpu.core_type = #tpu.core_type<tc>, window_params = [{transform_indices = @transform_0, window_bounds = array<i64: 1, 4, 128>}, {transform_indices = @transform_1, window_bounds = array<i64: 1, 1, 128>}, {transform_indices = @transform_2, window_bounds = array<i64: 1, 4, 1>}]} {
    %c0_i32 = arith.constant 0 : i32
    %0 = arith.cmpi eq, %arg1, %c0_i32 : i32
    %1 = arith.extui %0 : i1 to i32
    %c0_i32_0 = arith.constant 0 : i32
    %2 = arith.cmpi ne, %1, %c0_i32_0 : i32
    scf.if %2 {
      %cst_15 = arith.constant 0.000000e+00 : f32
      %28 = vector.broadcast %cst_15 : f32 to vector<4x128xf32>
      %c0_16 = arith.constant 0 : index
      %c0_17 = arith.constant 0 : index
      %29 = vector.load %arg5[%c0_16, %c0_17] : memref<4x128xf32, #tpu.memory_space<vmem>>, vector<4x128xf32>
      tpu.vector_store %arg5[%c0_16, %c0_17], %28 {strides = array<i32>} : memref<4x128xf32, #tpu.memory_space<vmem>>, vector<4x128xf32>,
      %cst_18 = arith.constant 0.000000e+00 : f32
      %30 = vector.broadcast %cst_18 : f32 to vector<4x128xf32>
      %c0_19 = arith.constant 0 : index
      %c0_20 = arith.constant 0 : index
      %31 = vector.load %arg6[%c0_19, %c0_20] : memref<4x128xf32, #tpu.memory_space<vmem>>, vector<4x128xf32>
      tpu.vector_store %arg6[%c0_19, %c0_20], %30 {strides = array<i32>} : memref<4x128xf32, #tpu.memory_space<vmem>>, vector<4x128xf32>,
    } else {
    }
    %c0 = arith.constant 0 : index
    %c0_1 = arith.constant 0 : index
    %c0_2 = arith.constant 0 : index
    %3 = vector.load %arg2[%c0, %c0_1, %c0_2] : memref<1x4x128xf32, #tpu.memory_space<vmem>>, vector<1x4x128xf32>
    %4 = vector.shape_cast %3 : vector<1x4x128xf32> to vector<4x128xf32>
    %c0_3 = arith.constant 0 : index
    %c0_4 = arith.constant 0 : index
    %c0_5 = arith.constant 0 : index
    %5 = vector.load %arg3[%c0_3, %c0_4, %c0_5] : memref<1x1x128xi32, #tpu.memory_space<vmem>>, vector<1x1x128xi32>
    %6 = vector.shape_cast %5 : vector<1x1x128xi32> to vector<1x128xi32>
    %7 = arith.negf %4 : vector<4x128xf32>
    %8 = math.exp %7 : vector<4x128xf32>
    %cst = arith.constant 1.000000e+00 : f32
    %9 = vector.broadcast %cst : f32 to vector<4x128xf32>
    %10 = arith.addf %9, %8 : vector<4x128xf32>
    %11 = arith.divf %9, %10 : vector<4x128xf32>
    %12 = tpu.iota {dimensions = array<i32: 0>} : vector<4x128xi32>
    %13 = vector.broadcast %6 : vector<1x128xi32> to vector<4x128xi32>
    %14 = arith.cmpi eq, %12, %13 : vector<4x128xi32>
    %15 = arith.extui %14 : vector<4x128xi1> to vector<4x128xi32>
    %16 = arith.sitofp %15 : vector<4x128xi32> to vector<4x128xf32>
    %c0_6 = arith.constant 0 : index
    %c0_7 = arith.constant 0 : index
    %17 = vector.load %arg5[%c0_6, %c0_7] : memref<4x128xf32, #tpu.memory_space<vmem>>, vector<4x128xf32>
    %18 = arith.mulf %16, %11 : vector<4x128xf32>
    %19 = arith.addf %17, %18 : vector<4x128xf32>
    %c0_8 = arith.constant 0 : index
    %c0_9 = arith.constant 0 : index
    %20 = vector.load %arg5[%c0_8, %c0_9] : memref<4x128xf32, #tpu.memory_space<vmem>>, vector<4x128xf32>
    tpu.vector_store %arg5[%c0_8, %c0_9], %19 {strides = array<i32>} : memref<4x128xf32, #tpu.memory_space<vmem>>, vector<4x128xf32>,
    %c0_10 = arith.constant 0 : index
    %c0_11 = arith.constant 0 : index
    %21 = vector.load %arg6[%c0_10, %c0_11] : memref<4x128xf32, #tpu.memory_space<vmem>>, vector<4x128xf32>
    %22 = arith.addf %16, %11 : vector<4x128xf32>
    %23 = arith.addf %21, %22 : vector<4x128xf32>
    %c0_12 = arith.constant 0 : index
    %c0_13 = arith.constant 0 : index
    %24 = vector.load %arg6[%c0_12, %c0_13] : memref<4x128xf32, #tpu.memory_space<vmem>>, vector<4x128xf32>
    tpu.vector_store %arg6[%c0_12, %c0_13], %23 {strides = array<i32>} : memref<4x128xf32, #tpu.memory_space<vmem>>, vector<4x128xf32>,
    %c1_i32 = arith.constant 1 : i32
    %25 = arith.cmpi eq, %arg1, %c1_i32 : i32
    %26 = arith.extui %25 : i1 to i32
    %c0_i32_14 = arith.constant 0 : i32
    %27 = arith.cmpi ne, %26, %c0_i32_14 : i32
    scf.if %27 {
      %c0_15 = arith.constant 0 : index
      %c0_16 = arith.constant 0 : index
      %28 = vector.load %arg5[%c0_15, %c0_16] : memref<4x128xf32, #tpu.memory_space<vmem>>, vector<4x128xf32>
      %cst_17 = arith.constant dense<0.000000e+00> : vector<4xf32>
      %29 = vector.multi_reduction <add>, %28, %cst_17 [1] : vector<4x128xf32> to vector<4xf32>
      %30 = vector.shape_cast %29 : vector<4xf32> to vector<4x1xf32>
      %c0_18 = arith.constant 0 : index
      %c0_19 = arith.constant 0 : index
      %31 = vector.load %arg6[%c0_18, %c0_19] : memref<4x128xf32, #tpu.memory_space<vmem>>, vector<4x128xf32>
      %cst_20 = arith.constant dense<0.000000e+00> : vector<4xf32>
      %32 = vector.multi_reduction <add>, %31, %cst_20 [1] : vector<4x128xf32> to vector<4xf32>
      %33 = vector.shape_cast %32 : vector<4xf32> to vector<4x1xf32>
      %cst_21 = arith.constant 2.000000e+00 : f32
      %34 = vector.broadcast %cst_21 : f32 to vector<4x1xf32>
      %35 = arith.mulf %34, %30 : vector<4x1xf32>
      %cst_22 = arith.constant 9.99999974E-6 : f32
      %36 = vector.broadcast %cst_22 : f32 to vector<4x1xf32>
      %37 = arith.addf %35, %36 : vector<4x1xf32>
      %cst_23 = arith.constant 9.99999974E-6 : f32
      %38 = vector.broadcast %cst_23 : f32 to vector<4x1xf32>
      %39 = arith.addf %33, %38 : vector<4x1xf32>
      %40 = arith.divf %37, %39 : vector<4x1xf32>
      %cst_24 = arith.constant 1.000000e+00 : f32
      %41 = vector.broadcast %cst_24 : f32 to vector<4x1xf32>
      %42 = arith.subf %41, %40 : vector<4x1xf32>
      %43 = vector.shape_cast %42 : vector<4x1xf32> to vector<1x4x1xf32>
      %c0_25 = arith.constant 0 : index
      %c0_26 = arith.constant 0 : index
      %c0_27 = arith.constant 0 : index
      %44 = vector.load %arg4[%c0_25, %c0_26, %c0_27] : memref<1x4x1xf32, #tpu.memory_space<vmem>>, vector<1x4x1xf32>
      tpu.vector_store %arg4[%c0_25, %c0_26, %c0_27], %43 {strides = array<i32>} : memref<1x4x1xf32, #tpu.memory_space<vmem>>, vector<1x4x1xf32>,
    } else {
    }
    return
  }
  func.func @transform_0(%arg0: i32, %arg1: i32) -> (i32, i32, i32) {
    %c0_i32 = arith.constant 0 : i32
    %c0_i32_0 = arith.constant 0 : i32
    return %arg0, %c0_i32, %arg1 : i32, i32, i32
  }
  func.func @transform_1(%arg0: i32, %arg1: i32) -> (i32, i32, i32) {
    %c0_i32 = arith.constant 0 : i32
    %c0_i32_0 = arith.constant 0 : i32
    return %arg0, %c0_i32, %arg1 : i32, i32, i32
  }
  func.func @transform_2(%arg0: i32, %arg1: i32) -> (i32, i32, i32) {
    %c0_i32 = arith.constant 0 : i32
    %c0_i32_0 = arith.constant 0 : i32
    %c0_i32_1 = arith.constant 0 : i32
    return %arg0, %c0_i32, %c0_i32_0 : i32, i32, i32
  }
}

</mosaic_0001>

<llo_original>
// kernel: tpu_custom_call.1
$region0: #{tpu_custom_call.1}
  #allocation0 [shape = 'u32[]', space=smem, size = 0x4, offset = 0x4, fixed_abs, tag = 'smem constant byte address 0x4 - core index']
  #allocation1 [shape = 'u32[144,128]{1,0:T(1,128)}', space=vmem, size = 0x12000, scoped, tag = 'internal scratch']
  #allocation2 [shape = 'f32[4,128]{1,0:T(4,128)}', space=vmem, size = 0x800, scoped, tag = 'scratch operand']
  #allocation3 [shape = 'f32[4,128]{1,0:T(4,128)}', space=vmem, size = 0x800, scoped, tag = 'scratch operand']
  %s0 = inlined_call_operand.hbm [shape: f32[2,4,256], index: 0, kind: input, shape index: {}]
  %s1 = inlined_call_operand.hbm [shape: s32[2,1,256], index: 1, kind: input, shape index: {}]
  %s2 = inlined_call_operand.vmem [shape: f32[2,4,1], index: 2, kind: output, shape index: {}]
  %s3 = sld [smem:[#allocation0]]
  $region57: #{tpu_custom_call.1} parent=0
    _
  %s5 = ssub.s32 1, %s3
  %s6 = scalar_select 0, %s5, %s3
  $region1: #{tpu_custom_call.1} parent=0
    #allocation4 [shape = 'u8[4096]{0}', space=vmem, size = 0x1000, scoped, tag = 'input window, operand 0']
    #allocation5 [shape = 's32[2]{0}', space=sflag, size = 0x8, scoped, tag = 'scoped memory for tpu_custom_call.1']
    #allocation6 [shape = 'u8[1024]{0}', space=vmem, size = 0x400, scoped, tag = 'input window, operand 1']
    #allocation7 [shape = 's32[2]{0}', space=sflag, size = 0x8, scoped, tag = 'scoped memory for tpu_custom_call.1']
    %7 = vsyncpa [#allocation5], 0
    %s8 = scalar_lea.sflag [#allocation5], 1
    %9 = vsyncpa %s8, 0
    %10 = vsyncpa [#allocation7], 0
    %s11 = scalar_lea.sflag [#allocation7], 1
    %12 = vsyncpa %s11, 0
    loop: start=0, step=1, limit=6
    $region2: #{tpu_custom_call.1} parent=1 // loop_pre_header
      _
    $region3: #{tpu_custom_call.1} parent=1 // loop_header
      %s14 = sphi 0, %s18
      %p15 = scmp.ge.s32.totalorder %s14, 6
      %s21 = sphi 0, %s33
      %s22 = sphi 0, %s29
      %s23 = sphi 0, %s21
      %s24 = sphi 0, %s22
      %s25 = sphi 0, %s23
      %s26 = sphi 0, %s24
      %s38 = sphi 0, %s40
      %s41 = sphi 0, %s38
      %s42 = sphi 0, %s41
      %s58 = sphi 0, %s42
      %s66 = sphi 0, %s68
      %s69 = sphi 0, %s66
      %s70 = sphi 0, %s69
      %s86 = sphi 0, %s70
      %s92 = sphi 0, %s94
      %s95 = sphi 0, %s92
      %s96 = sphi 0, %s95
      %s112 = sphi 0, %s96
    $region4: #{tpu_custom_call.1} parent=1 // loop_header_branch
      %17 = sbr.rel (%p15) target = $region8
    $region5: #{tpu_custom_call.1} parent=1 // loop_body
      %s19 = ssub.s32 %s14, 1
      %s20 = ssub.s32 %s14, 2
      %s27 = sadd.s32 1, %s22
      %p28 = scmp.ge.s32.totalorder %s27, 2
      %s29 = scalar_select %p28, 0, %s27
      %s30 = sadd.s32 1, %s21
      %s31 = scalar_select %p28, %s30, %s21
      %p32 = scmp.ge.s32.totalorder %s31, 2
      %s33 = scalar_select %p32, 0, %s31
      %s34 = ssub.s32 %s21, %s33
      %s35 = ssub.s32 %s22, %s29
      %s36 = sor.u32 %s34, %s35
      %p37 = scmp.eq.s32.totalorder %s36, 0
      %s39 = sadd.s32 %s38, 1
      %s40 = scalar_select %p37, %s38, %s39
      %p43 = pneg %p37
      %p44 = scmp.eq.s32.totalorder %s14, 3
      %p45 = por %p43, %p44
      %p46 = scmp.ne.s32.totalorder %s38, %s41
      %p47 = scmp.eq.s32.totalorder %s14, 0
      %p48 = por %p46, %p47
      %p49 = scmp.ne.s32.totalorder %s38, %s41
      %p50 = scmp.eq.s32.totalorder %s19, 3
      %p51 = por %p49, %p50
      %p52 = scmp.ne.s32.totalorder %s41, %s42
      %p53 = scmp.eq.s32.totalorder %s19, 0
      %p54 = por %p52, %p53
      %p55 = scmp.ne.s32.totalorder %s41, %s42
      %p56 = scmp.eq.s32.totalorder %s20, 3
      %p57 = por %p55, %p56
      %p59 = scmp.ne.s32.totalorder %s42, %s58
      %p60 = scmp.eq.s32.totalorder %s20, 0
      %p61 = por %p59, %p60
      %s62 = ssub.s32 %s21, %s33
      %s63 = ssub.s32 %s22, %s29
      %s64 = sor.u32 %s62, %s63
      %p65 = scmp.eq.s32.totalorder %s64, 0
      %s67 = sadd.s32 %s66, 1
      %s68 = scalar_select %p65, %s66, %s67
      %p71 = pneg %p65
      %p72 = scmp.eq.s32.totalorder %s14, 3
      %p73 = por %p71, %p72
      %p74 = scmp.ne.s32.totalorder %s66, %s69
      %p75 = scmp.eq.s32.totalorder %s14, 0
      %p76 = por %p74, %p75
      %p77 = scmp.ne.s32.totalorder %s66, %s69
      %p78 = scmp.eq.s32.totalorder %s19, 3
      %p79 = por %p77, %p78
      %p80 = scmp.ne.s32.totalorder %s69, %s70
      %p81 = scmp.eq.s32.totalorder %s19, 0
      %p82 = por %p80, %p81
      %p83 = scmp.ne.s32.totalorder %s69, %s70
      %p84 = scmp.eq.s32.totalorder %s20, 3
      %p85 = por %p83, %p84
      %p87 = scmp.ne.s32.totalorder %s70, %s86
      %p88 = scmp.eq.s32.totalorder %s20, 0
      %p89 = por %p87, %p88
      %s90 = ssub.s32 %s21, %s33
      %p91 = scmp.eq.s32.totalorder %s90, 0
      %s93 = sadd.s32 %s92, 1
      %s94 = scalar_select %p91, %s92, %s93
      %p97 = pneg %p91
      %p98 = scmp.eq.s32.totalorder %s14, 3
      %p99 = por %p97, %p98
      %p100 = scmp.ne.s32.totalorder %s92, %s95
      %p101 = scmp.eq.s32.totalorder %s14, 0
      %p102 = por %p100, %p101
      %p103 = scmp.ne.s32.totalorder %s92, %s95
      %p104 = scmp.eq.s32.totalorder %s19, 3
      %p105 = por %p103, %p104
      %p106 = scmp.ne.s32.totalorder %s95, %s96
      %p107 = scmp.eq.s32.totalorder %s19, 0
      %p108 = por %p106, %p107
      %p109 = scmp.ne.s32.totalorder %s95, %s96
      %p110 = scmp.eq.s32.totalorder %s20, 3
      %p111 = por %p109, %p110
      %p113 = scmp.ne.s32.totalorder %s96, %s112
      %p114 = scmp.eq.s32.totalorder %s20, 0
      %p115 = por %p113, %p114
      %p116 = scmp.le.s32.totalorder 1, %s14
      %p117 = scmp.lt.s32.totalorder %s14, 5
      %p118 = pnand %p116, %p117
      %p119 = pneg %p118
      // Predicated region
      $region9: #{tpu_custom_call.1} parent=5 // pred_check
        _
      $region10: #{tpu_custom_call.1} parent=5 // pred_check_branch
        %121 = sbr.rel (%p118) target = $region12
      $region11: #{tpu_custom_call.1} parent=5 // pred_region
        %s122 = ssub.s32 %s14, 1
      $region12: #{tpu_custom_call.1} parent=5 // pred_fallthru
        _
      %p123 = scmp.lt.s32.totalorder %s14, 4
      // Predicated region
      $region13: #{tpu_custom_call.1} parent=5 // pred_check
        %p124 = pneg %p123
      $region14: #{tpu_custom_call.1} parent=5 // pred_check_branch
        %126 = sbr.rel (%p124) target = $region16
      $region15: #{tpu_custom_call.1} parent=5 // pred_region
        // Predicated region
        $region17: #{tpu_custom_call.1} parent=15 // pred_check
          %p127 = pneg %p48
        $region18: #{tpu_custom_call.1} parent=15 // pred_check_branch
          %129 = sbr.rel (%p127) target = $region20
        $region19: #{tpu_custom_call.1} parent=15 // pred_region
          %s130 = sand.u32 %s38, 1
          %s131 = scalar_lea.sflag [#allocation5], %s130
          %s132 = sand.u32 %s38, 1
          %s133 = smul.addr %s132, 4
          %s134 = scalar_lea.vmem [#allocation4], %s133
          %s136 = ssub.s32 64, 64
          %137 = vsyncadd %s131, %s136
          %s138 = smul.addr %s21, 2
          %s139 = sadd.s32 %s22, %s138
          %s140 = smul.addr %s139, 64
          %s141 = scalar_lea.hbm %s0, %s140
          %s143 = sshll.u32 %s134, 4
          %s144 = int_to_ptr.vmem [resolvable:$true] %s143
          %146 = dma.hbm_to_vmem [thread:$0]  %s141, 64, %s144, %s131
        $region20: #{tpu_custom_call.1} parent=15 // pred_fallthru
          _
        // Predicated region
        $region21: #{tpu_custom_call.1} parent=15 // pred_check
          %p147 = pneg %p76
        $region22: #{tpu_custom_call.1} parent=15 // pred_check_branch
          %149 = sbr.rel (%p147) target = $region24
        $region23: #{tpu_custom_call.1} parent=15 // pred_region
          %s150 = sand.u32 %s66, 1
          %s151 = scalar_lea.sflag [#allocation7], %s150
          %s152 = sand.u32 %s66, 1
          %s153 = scalar_lea.vmem [#allocation6], %s152
          %s155 = ssub.s32 16, 16
          %156 = vsyncadd %s151, %s155
          %s157 = smul.addr %s21, 2
          %s158 = sadd.s32 %s22, %s157
          %s159 = smul.addr %s158, 16
          %s160 = scalar_lea.hbm %s1, %s159
          %s162 = sshll.u32 %s153, 4
          %s163 = int_to_ptr.vmem [resolvable:$true] %s162
          %165 = dma.hbm_to_vmem [thread:$0]  %s160, 16, %s163, %s151
        $region24: #{tpu_custom_call.1} parent=15 // pred_fallthru
          _
      $region16: #{tpu_custom_call.1} parent=5 // pred_fallthru
        _
      %p166 = scmp.le.s32.totalorder 1, %s14
      %p167 = scmp.lt.s32.totalorder %s14, 5
      %p168 = pnand %p166, %p167
      %p169 = pneg %p168
      // Predicated region
      $region25: #{tpu_custom_call.1} parent=5 // pred_check
        _
      $region26: #{tpu_custom_call.1} parent=5 // pred_check_branch
        %171 = sbr.rel (%p168) target = $region28
      $region27: #{tpu_custom_call.1} parent=5 // pred_region
        %s172 = ssub.s32 %s14, 1
        %s173 = sand.u32 %s41, 1
        %s174 = scalar_lea.sflag [#allocation5], %s173
        %s175 = sand.u32 %s41, 1
        %s176 = smul.addr %s175, 4
        %s177 = scalar_lea.vmem [#allocation4], %s176
        // Predicated region
        $region29: #{tpu_custom_call.1} parent=27 // pred_check
          %p178 = pneg %p54
        $region30: #{tpu_custom_call.1} parent=27 // pred_check_branch
          %180 = sbr.rel (%p178) target = $region32
        $region31: #{tpu_custom_call.1} parent=27 // pred_region
          %181 = dma.done %s174, 64
        $region32: #{tpu_custom_call.1} parent=27 // pred_fallthru
          _
        %s182 = sand.u32 %s69, 1
        %s183 = scalar_lea.sflag [#allocation7], %s182
        %s184 = sand.u32 %s69, 1
        %s185 = scalar_lea.vmem [#allocation6], %s184
        // Predicated region
        $region33: #{tpu_custom_call.1} parent=27 // pred_check
          %p186 = pneg %p82
        $region34: #{tpu_custom_call.1} parent=27 // pred_check_branch
          %188 = sbr.rel (%p186) target = $region36
        $region35: #{tpu_custom_call.1} parent=27 // pred_region
          %189 = dma.done %s183, 16
        $region36: #{tpu_custom_call.1} parent=27 // pred_fallthru
          _
        %s190 = sand.u32 %s41, 1
        %s191 = scalar_lea.sflag [#allocation5], %s190
        %s192 = sand.u32 %s41, 1
        %s193 = smul.addr %s192, 4
        %s194 = scalar_lea.vmem [#allocation4], %s193
        %p195 = pneg %p54
        %p196 = pneg %p51
        %s197 = sand.u32 %s69, 1
        %s198 = scalar_lea.sflag [#allocation7], %s197
        %s199 = sand.u32 %s69, 1
        %s200 = scalar_lea.vmem [#allocation6], %s199
        %p201 = pneg %p82
        %p202 = pneg %p79
        %p203 = pneg %p108
        %p204 = pneg %p105
        %p205 = scmp.lt.s32.totalorder %s23, 1
        %s206 = scalar_select %p205, %s23, 1
        %s207 = smul.addr %s206, 4
        %s208 = scalar_lea.vmem %s2, %s207
        %p209 = scmp.lt.s32.totalorder %s23, 1
        %s210 = scalar_select %p209, %s23, 1
        %s211 = smul.addr %s210, 4
        %s212 = scalar_lea.vmem %s2, %s211
        %p213 = scmp.eq.s32.totalorder %s24, 0
        // Predicated region
        $region37: #{tpu_custom_call.1} parent=27 // pred_check
          %p214 = pneg %p213
        $region38: #{tpu_custom_call.1} parent=27 // pred_check_branch
          %216 = sbr.rel (%p214) target = $region40
        $region39: #{tpu_custom_call.1} parent=27 // pred_region
          %217 = vst [vmem:[#allocation2] sm:$0xf] 0.0
          %218 = vst [vmem:[#allocation3] sm:$0xf] 0.0
        $region40: #{tpu_custom_call.1} parent=27 // pred_fallthru
          _
        %v219 = vld [vmem:[%s177] sm:$0xf]
        %v220 = vld [vmem:[%s185] sm:$0x1]
        %v221 = vxor.u32 %v219, 2147483648
        %v222 = vmul.f32 %v221, 1.442695
        %v223 = vpow.pop %v222
        %v224 = vadd.f32 %v223, 1.0
        %v225 = vrcp.pop %v224
        %v226 = vmul.f32 1.0, %v225
        %v227 = vlaneseq
        %v228 = vshrl.u32 %v227, 7
        %v229 = vlaneseq
        %v230 = vshrl.u32 %v229, 7
        %v231 = vsub.s32 0, %v230
        %v232 = vrot.slane %v220, %v231
        %vm233 = vcmp.eq.s32.totalorder %v228, %v232
        %v234 = vsel %vm233, 1, 0
        %v235 = vcvt.s32.f32 %v234
        %v236 = vld [vmem:[#allocation2] sm:$0xf]
        %v237 = vmul.f32 %v235, %v226
        %v238 = vadd.f32 %v236, %v237
        %239 = vst [vmem:[#allocation2] sm:$0xf] %v238
        %v240 = vld [vmem:[#allocation3] sm:$0xf]
        %v241 = vadd.f32 %v235, %v226
        %v242 = vadd.f32 %v240, %v241
        %243 = vst [vmem:[#allocation3] sm:$0xf] %v242
        %p244 = scmp.eq.s32.totalorder %s24, 1
        // Predicated region
        $region41: #{tpu_custom_call.1} parent=27 // pred_check
          %p245 = pneg %p244
        $region42: #{tpu_custom_call.1} parent=27 // pred_check_branch
          %247 = sbr.rel (%p245) target = $region44
        $region43: #{tpu_custom_call.1} parent=27 // pred_region
          %v248 = vld [vmem:[#allocation2] sm:$0xf]
          %vm249 = vcmask 1043456
          %v250 = vsel %vm249, %v248, 0.0
          %251 = vadd.xlane.f32.xlu0 %v250
          %v252 = vpop.xlane.xlu0 %251
          %v253 = vld [vmem:[#allocation3] sm:$0xf]
          %v254 = vsel %vm249, %v253, 0.0
          %255 = vadd.xlane.f32.xlu0 %v254
          %v256 = vpop.xlane.xlu0 %255
          %v257 = vmul.f32 %v252, 2.0
          %v258 = vadd.f32 %v257, 1e-05
          %v259 = vadd.f32 %v256, 1e-05
          %v260 = vrcp.pop %v259
          %v261 = vmul.f32 %v258, %v260
          %v262 = vsub.f32 1.0, %v261
          %vm263 = vcmask 3072
          %264 = vst.msk [vmem:[%s212] sm:$0xf] %vm263, %v262
        $region44: #{tpu_custom_call.1} parent=27 // pred_fallthru
          _
        %p265 = scmp.lt.s32.totalorder %s23, 1
        %s266 = scalar_select %p265, %s23, 1
        %s267 = smul.addr %s266, 4
        %s268 = scalar_lea.vmem %s2, %s267
        // Predicated region
        $region45: #{tpu_custom_call.1} parent=27 // pred_check
          %p269 = pneg %p105
        $region46: #{tpu_custom_call.1} parent=27 // pred_check_branch
          %271 = sbr.rel (%p269) target = $region48
        $region47: #{tpu_custom_call.1} parent=27 // pred_region
          _
        $region48: #{tpu_custom_call.1} parent=27 // pred_fallthru
          _
      $region28: #{tpu_custom_call.1} parent=5 // pred_fallthru
        _
      %p272 = scmp.le.s32.totalorder 2, %s14
      // Predicated region
      $region49: #{tpu_custom_call.1} parent=5 // pred_check
        %p273 = pneg %p272
      $region50: #{tpu_custom_call.1} parent=5 // pred_check_branch
        %275 = sbr.rel (%p273) target = $region52
      $region51: #{tpu_custom_call.1} parent=5 // pred_region
        %s276 = ssub.s32 %s14, 2
        // Predicated region
        $region53: #{tpu_custom_call.1} parent=51 // pred_check
          %p277 = pneg %p111
        $region54: #{tpu_custom_call.1} parent=51 // pred_check_branch
          %279 = sbr.rel (%p277) target = $region56
        $region55: #{tpu_custom_call.1} parent=51 // pred_region
          %p280 = scmp.lt.s32.totalorder %s25, 1
          %s281 = scalar_select %p280, %s25, 1
          %s282 = smul.addr %s281, 4
          %s283 = scalar_lea.vmem %s2, %s282
        $region56: #{tpu_custom_call.1} parent=51 // pred_fallthru
          _
      $region52: #{tpu_custom_call.1} parent=5 // pred_fallthru
        _
    $region6: #{tpu_custom_call.1} parent=1 // loop_footer
      %s18 = sadd.s32 1, %s14
    $region7: #{tpu_custom_call.1} parent=1 // loop_footer_branch
      %13 = sbr.rel target = $region3
    $region8: #{tpu_custom_call.1} parent=1 // loop_exit
      _
    %284 = vsyncpa [#allocation5], 1
    %s285 = scalar_lea.sflag [#allocation5], 1
    %286 = vsyncpa %s285, 1
    %287 = vsyncpa [#allocation7], 1
    %s288 = scalar_lea.sflag [#allocation7], 1
    %289 = vsyncpa %s288, 1

</llo_original>
